<compile_context>
chip_gen: v5e
topology: v5e:2x2
jax: 0.10.0
libtpu: 0.0.40
codegen_flags: <defaults>
</compile_context>

<pallas_src>
import functools

import numpy as np

import jax
import jax.numpy as jnp
from jax import lax
from jax.experimental import pallas as pl
from jax.experimental.pallas import tpu as pltpu

_LANES = 128
_CHUNK_ROWS = 128                    # rows per inner accumulation chunk
_DEF_BLOCK_BYTES = 4 * 1024 * 1024   # VMEM bytes per input block (per buffer)
_DEF_VMEM_LIMIT = 40 * 1024 * 1024   # explicit scoped-VMEM limit (fits all gens)


def _round_up(x, m):
    return (x + m - 1) // m * m


# ----------------------------------------------------------------------------
# Pallas kernel: per-core running |real - fake| sum in an (8, cols) output
# block (resident accumulator); wrapper sums the per-core partials.
# ----------------------------------------------------------------------------
def _abs_diff_sum_kernel(f_ref, r_ref, o_ref, *, bm, chunk, nchunks, spc,
                         valid_rows, unroll):
    c = pl.program_id(0)        # core index (parallel)
    i = pl.program_id(1)        # step within this core's range (arbitrary)
    cols = f_ref.shape[1]

    @pl.when(i == 0)
    def _():
        o_ref[...] = jnp.zeros_like(o_ref)

    # *Unclamped* global row offset of this step (the DMA index_map clamps to
    # the last valid block; the masking below uses the unclamped offset so
    # overhanging / out-of-range steps contribute exactly zero).
    block_start = (c * spc + i) * bm

    def accumulate(masked):
        def body(k, acc):
            r0 = k * chunk
            if not isinstance(r0, int):
                r0 = pl.multiple_of(r0, chunk)
            f = f_ref[pl.ds(r0, chunk), :].astype(jnp.float32)
            r = r_ref[pl.ds(r0, chunk), :].astype(jnp.float32)
            d = jnp.abs(r - f)
            if masked:
                row = block_start + r0 + lax.broadcasted_iota(
                    jnp.int32, (chunk, 1), 0)
                # Keep this a select (NOT a multiply-by-mask): overhanging rows
                # hold unspecified data (possibly NaN/Inf) that must be dropped.
                d = jnp.where(row < valid_rows, d, 0.0)
            # (chunk, cols) -> (chunk//8, 8, cols): the leading-axis sum is
            # pure VPU vreg adds; no XLU and no VMEM slab in the hot loop.
            return acc + jnp.sum(d.reshape(chunk // 8, 8, cols), axis=0)

        init = jnp.zeros((8, cols), jnp.float32)
        if nchunks == 1:
            part = body(0, init)
        else:
            part = lax.fori_loop(0, nchunks, body, init, unroll=unroll)
        o_ref[...] += part

    needs_mask = block_start + bm > valid_rows

    @pl.when(jnp.logical_not(needs_mask))
    def _():
        accumulate(False)          # steady-state: mask-free path

    @pl.when(needs_mask)
    def _():
        accumulate(True)           # ragged / fully-out-of-range tail blocks


def _abs_diff_sum(fake2d, real2d, *, num_cores=2, block_rows=None,
                  block_bytes=_DEF_BLOCK_BYTES,
                  vmem_limit_bytes=_DEF_VMEM_LIMIT):
    """Unscaled sum of |real2d - fake2d| (f32 accumulation). Inputs: (R, cols)."""
    assert fake2d.shape == real2d.shape
    R, cols = fake2d.shape
    itemsize = min(fake2d.dtype.itemsize, real2d.dtype.itemsize)
    row_align = max(8, 32 // itemsize)     # sublane tile: 8 f32 / 16 bf16 / 32 int8
    cols_pad = _round_up(cols, _LANES)     # VMEM lane padding of one row
    r_aligned = _round_up(R, row_align)

    # Block-row sizing from a VMEM byte budget (f32 footprint, conservative).
    if block_rows is None:
        block_rows = max(_CHUNK_ROWS, block_bytes // (cols_pad * 4))
    bm = min(_round_up(block_rows, row_align), r_aligned)
    if bm > _CHUNK_ROWS:
        bm = _round_up(bm, _CHUNK_ROWS)
    chunk = min(bm, _CHUNK_ROWS)
    nchunks = bm // chunk
    if nchunks % 8 == 0:
        unroll = 8
    elif nchunks % 4 == 0:
        unroll = 4
    elif nchunks % 2 == 0:
        unroll = 2
    else:
        unroll = 1

    num_blocks = pl.cdiv(R, bm)
    nc = max(1, min(num_cores, num_blocks))   # leading "parallel" (megacore) axis
    spc = pl.cdiv(num_blocks, nc)             # steps per core

    def in_map(c, i, spc=spc, last=num_blocks - 1):
        # Clamp so steps past the end of the data re-read the last valid block;
        # their contribution is masked to zero in the kernel.
        return (jnp.minimum(c * spc + i, last), 0)

    kernel = functools.partial(
        _abs_diff_sum_kernel, bm=bm, chunk=chunk, nchunks=nchunks, spc=spc,
        valid_rows=R, unroll=unroll)

    partials = pl.pallas_call(
        kernel,
        out_shape=jax.ShapeDtypeStruct((nc * 8, cols), jnp.float32),
        grid_spec=pltpu.PrefetchScalarGridSpec(
            num_scalar_prefetch=0,
            grid=(nc, spc),
            in_specs=[pl.BlockSpec((bm, cols), in_map),
                      pl.BlockSpec((bm, cols), in_map)],
            out_specs=pl.BlockSpec((8, cols), lambda c, i: (c, 0)),
        ),
        compiler_params=pltpu.CompilerParams(
            dimension_semantics=("parallel", "arbitrary"),
            vmem_limit_bytes=vmem_limit_bytes,
        ),
    )(fake2d, real2d)
    return jnp.sum(partials)


# ----------------------------------------------------------------------------
# Bilinear resize, align_corners=True (matches F.interpolate), as two small
# dense interpolation-matrix matmuls (MXU-friendly, no gathers).
# ----------------------------------------------------------------------------
def _interp_matrix_align_corners(n_in, n_out):
    m = np.zeros((n_out, n_in), dtype=np.float32)
    if n_out == 1:
        m[0, 0] = 1.0
        return jnp.asarray(m)
    scale = (n_in - 1) / (n_out - 1)
    for o in range(n_out):
        s = o * scale
        i0 = min(int(np.floor(s)), n_in - 1)
        i1 = min(i0 + 1, n_in - 1)
        w = s - i0
        m[o, i0] += 1.0 - w
        m[o, i1] += w
    return jnp.asarray(m)


def _bilinear_resize_matmul(x, h_out, w_out):
    c, h, w = x.shape
    wy = _interp_matrix_align_corners(h, h_out)   # (h_out, h)
    wx = _interp_matrix_align_corners(w, w_out)   # (w_out, w)
    x = x.astype(jnp.float32)
    y = jnp.einsum('oh,chw->cow', wy, x)
    out = jnp.einsum('cow,pw->cop', y, wx)
    # TODO(synk): fuse the resize into the reduction kernel (scalar-prefetched
    # row pairs + in-kernel lerp) to avoid the HBM round-trip of the resized map.
    return out


# ----------------------------------------------------------------------------
# GradLoss forward
# ----------------------------------------------------------------------------
def grad_loss(grad_fake, grad_real, *, num_cores=2, block_rows=None):
    if grad_fake.shape != grad_real.shape:
        _, H, W = grad_real.shape
        grad_fake = _bilinear_resize_matmul(grad_fake, H, W)

    n = int(grad_real.size)
    last = int(grad_real.shape[-1])
    # Copy-free 2-D views (reshape of a contiguous array is a bitcast):
    #   * lane-dense (N/128, 128) when the element count is 128-aligned;
    #   * otherwise (N/last_dim, last_dim) with the full last dim as lanes.
    if n % _LANES == 0:
        view = (n // _LANES, _LANES)
    else:
        view = (n // last, last)
    total = _abs_diff_sum(grad_fake.reshape(view), grad_real.reshape(view),
                          num_cores=num_cores, block_rows=block_rows)
    return total / jnp.float32(n)


# ----------------------------------------------------------------------------
# Pure-JAX reference (gather-based bilinear, plain mean)
# ----------------------------------------------------------------------------
def _bilinear_align_corners_gather(x, h_out, w_out):
    c, h, w = x.shape
    x = x.astype(jnp.float32)

    def coords(n_in, n_out):
        if n_out == 1:
            return jnp.zeros((1,), jnp.float32)
        return jnp.arange(n_out, dtype=jnp.float32) * ((n_in - 1) / (n_out - 1))

    ys, xs = coords(h, h_out), coords(w, w_out)
    y0 = jnp.clip(jnp.floor(ys).astype(jnp.int32), 0, h - 1)
    x0 = jnp.clip(jnp.floor(xs).astype(jnp.int32), 0, w - 1)
    y1 = jnp.minimum(y0 + 1, h - 1)
    x1 = jnp.minimum(x0 + 1, w - 1)
    wy = (ys - y0.astype(jnp.float32))[None, :, None]
    wx = (xs - x0.astype(jnp.float32))[None, None, :]

    def gather(yi, xi):
        return x[:, yi, :][:, :, xi]

    top = gather(y0, x0) * (1.0 - wx) + gather(y0, x1) * wx
    bot = gather(y1, x0) * (1.0 - wx) + gather(y1, x1) * wx
    return top * (1.0 - wy) + bot * wy


def _ref_grad_loss(grad_fake, grad_real):
    if grad_fake.shape != grad_real.shape:
        _, H, W = grad_real.shape
        grad_fake = _bilinear_align_corners_gather(grad_fake, H, W)
    return jnp.mean(jnp.abs(grad_real.astype(jnp.float32) -
                            grad_fake.astype(jnp.float32)))


if __name__ == "__main__":
    key = jax.random.PRNGKey(0)
    k1, k2, k3, k4, k5, k6, k7 = jax.random.split(key, 7)

    # Case 1: matching shapes, 128-aligned element count -> lane-dense (8, 128)
    # view, single block, mask-free path.
    grad_real = jax.random.normal(k1, (4, 16, 16), dtype=jnp.float32)
    grad_fake = jax.random.normal(k2, (4, 16, 16), dtype=jnp.float32)
    out1 = jax.block_until_ready(grad_loss(grad_fake, grad_real))
    ref1 = _ref_grad_loss(grad_fake, grad_real)
    assert jnp.allclose(out1, ref1, rtol=1e-5, atol=1e-5), (out1, ref1)

    # Case 2: mismatched shapes -> matmul-based align_corners=True bilinear
    # resize, checked against the gather-based reference resize.
    grad_fake_small = jax.random.normal(k3, (4, 8, 8), dtype=jnp.float32)
    out2 = jax.block_until_ready(grad_loss(grad_fake_small, grad_real))
    ref2 = _ref_grad_loss(grad_fake_small, grad_real)
    assert jnp.allclose(out2, ref2, rtol=1e-5, atol=1e-5), (out2, ref2)

    # Case 3: element count not 128-aligned -> copy-free (C*H, W) fallback view;
    # small block_rows forces a multi-block grid, the 2-core split and the
    # ragged last-block mask.
    grad_real3 = jax.random.normal(k4, (3, 20, 40), dtype=jnp.float32)
    grad_fake3 = jax.random.normal(k5, (3, 20, 40), dtype=jnp.float32)
    out3 = jax.block_until_ready(grad_loss(grad_fake3, grad_real3,
                                           block_rows=16))
    ref3 = _ref_grad_loss(grad_fake3, grad_real3)
    assert jnp.allclose(out3, ref3, rtol=1e-5, atol=1e-5), (out3, ref3)

    # Case 4: lane-dense view with an odd block count -> the second core gets a
    # clamped, fully-masked trailing step (exercises the clamp path).
    grad_real4 = jax.random.normal(k6, (4, 40, 64), dtype=jnp.float32)
    grad_fake4 = jax.random.normal(k7, (4, 40, 64), dtype=jnp.float32)
    out4 = jax.block_until_ready(grad_loss(grad_fake4, grad_real4,
                                           block_rows=32))
    ref4 = _ref_grad_loss(grad_fake4, grad_real4)
    assert jnp.allclose(out4, ref4, rtol=1e-5, atol=1e-5), (out4, ref4)

    # Case 5: bf16 inputs stream through at half the HBM bytes; accumulation is
    # still f32 in-kernel (block rows respect the (16, 128) bf16 tile).
    grad_real5 = grad_real.astype(jnp.bfloat16)
    grad_fake5 = grad_fake.astype(jnp.bfloat16)
    out5 = jax.block_until_ready(grad_loss(grad_fake5, grad_real5))
    ref5 = _ref_grad_loss(grad_fake5, grad_real5)
    assert jnp.allclose(out5, ref5, rtol=1e-5, atol=1e-5), (out5, ref5)

    print("KERNEL_OK")
</pallas_src>

<mosaic_0001>
module attributes {stable_mosaic.version = 11 : i64} {
  func.func @_abs_diff_sum_kernel(%arg0: i32, %arg1: i32, %arg2: memref<8x128xf32, #tpu.memory_space<vmem>>, %arg3: memref<8x128xf32, #tpu.memory_space<vmem>>, %arg4: memref<8x128xf32, #tpu.memory_space<vmem>>) attributes {dimension_semantics = [#tpu.dimension_semantics<parallel>, #tpu.dimension_semantics<arbitrary>], iteration_bounds = array<i64: 1, 1>, scalar_prefetch = 0 : i64, scratch_operands = 0 : i64, tpu.core_type = #tpu.core_type<tc>, window_params = [{transform_indices = @transform_0, window_bounds = array<i64: 8, 128>}, {transform_indices = @transform_1, window_bounds = array<i64: 8, 128>}, {transform_indices = @transform_2, window_bounds = array<i64: 8, 128>}]} {
    %c0_i32 = arith.constant 0 : i32
    %0 = arith.cmpi eq, %arg1, %c0_i32 : i32
    %1 = arith.extui %0 : i1 to i32
    %c0_i32_0 = arith.constant 0 : i32
    %2 = arith.cmpi ne, %1, %c0_i32_0 : i32
    scf.if %2 {
      %cst = arith.constant 0.000000e+00 : f32
      %13 = vector.broadcast %cst : f32 to vector<8x128xf32>
      %c0 = arith.constant 0 : index
      %c0_5 = arith.constant 0 : index
      %14 = vector.load %arg4[%c0, %c0_5] : memref<8x128xf32, #tpu.memory_space<vmem>>, vector<8x128xf32>
      tpu.vector_store %arg4[%c0, %c0_5], %13 {strides = array<i32>} : memref<8x128xf32, #tpu.memory_space<vmem>>, vector<8x128xf32>,
    } else {
    }
    %c1_i32 = arith.constant 1 : i32
    %3 = arith.muli %arg0, %c1_i32 : i32
    %4 = arith.addi %3, %arg1 : i32
    %c8_i32 = arith.constant 8 : i32
    %5 = arith.muli %4, %c8_i32 : i32
    %c8_i32_1 = arith.constant 8 : i32
    %6 = arith.addi %5, %c8_i32_1 : i32
    %c8_i32_2 = arith.constant 8 : i32
    %7 = arith.cmpi sgt, %6, %c8_i32_2 : i32
    %true = arith.constant true
    %8 = arith.xori %7, %true : i1
    %9 = arith.extui %8 : i1 to i32
    %c0_i32_3 = arith.constant 0 : i32
    %10 = arith.cmpi ne, %9, %c0_i32_3 : i32
    scf.if %10 {
      %cst = arith.constant 0.000000e+00 : f32
      %13 = vector.broadcast %cst : f32 to vector<8x128xf32>
      %c0 = arith.constant 0 : index
      %c0_5 = arith.constant 0 : index
      %14 = vector.load %arg2[%c0, %c0_5] : memref<8x128xf32, #tpu.memory_space<vmem>>, vector<8x128xf32>
      %c0_6 = arith.constant 0 : index
      %c0_7 = arith.constant 0 : index
      %15 = vector.load %arg3[%c0_6, %c0_7] : memref<8x128xf32, #tpu.memory_space<vmem>>, vector<8x128xf32>
      %16 = arith.subf %15, %14 : vector<8x128xf32>
      %17 = math.absf %16 : vector<8x128xf32>
      %18 = vector.shape_cast %17 : vector<8x128xf32> to vector<1x8x128xf32>
      %cst_8 = arith.constant dense<0.000000e+00> : vector<8x128xf32>
      %19 = vector.multi_reduction <add>, %18, %cst_8 [0] : vector<1x8x128xf32> to vector<8x128xf32>
      %20 = arith.addf %13, %19 : vector<8x128xf32>
      %c0_9 = arith.constant 0 : index
      %c0_10 = arith.constant 0 : index
      %21 = vector.load %arg4[%c0_9, %c0_10] : memref<8x128xf32, #tpu.memory_space<vmem>>, vector<8x128xf32>
      %22 = arith.addf %21, %20 : vector<8x128xf32>
      %c0_11 = arith.constant 0 : index
      %c0_12 = arith.constant 0 : index
      %23 = vector.load %arg4[%c0_11, %c0_12] : memref<8x128xf32, #tpu.memory_space<vmem>>, vector<8x128xf32>
      tpu.vector_store %arg4[%c0_11, %c0_12], %22 {strides = array<i32>} : memref<8x128xf32, #tpu.memory_space<vmem>>, vector<8x128xf32>,
    } else {
    }
    %11 = arith.extui %7 : i1 to i32
    %c0_i32_4 = arith.constant 0 : i32
    %12 = arith.cmpi ne, %11, %c0_i32_4 : i32
    scf.if %12 {
      %cst = arith.constant 0.000000e+00 : f32
      %13 = vector.broadcast %cst : f32 to vector<8x128xf32>
      %c0 = arith.constant 0 : index
      %c0_5 = arith.constant 0 : index
      %14 = vector.load %arg2[%c0, %c0_5] : memref<8x128xf32, #tpu.memory_space<vmem>>, vector<8x128xf32>
      %c0_6 = arith.constant 0 : index
      %c0_7 = arith.constant 0 : index
      %15 = vector.load %arg3[%c0_6, %c0_7] : memref<8x128xf32, #tpu.memory_space<vmem>>, vector<8x128xf32>
      %16 = arith.subf %15, %14 : vector<8x128xf32>
      %17 = math.absf %16 : vector<8x128xf32>
      %c0_i32_8 = arith.constant 0 : i32
      %18 = arith.addi %5, %c0_i32_8 : i32
      %19 = tpu.iota {dimensions = array<i32: 0>} : vector<8x1xi32>
      %20 = vector.broadcast %18 : i32 to vector<8x1xi32>
      %21 = arith.addi %20, %19 : vector<8x1xi32>
      %c8_i32_9 = arith.constant 8 : i32
      %22 = vector.broadcast %c8_i32_9 : i32 to vector<8x1xi32>
      %23 = arith.cmpi slt, %21, %22 : vector<8x1xi32>
      %cst_10 = arith.constant 0.000000e+00 : f32
      %24 = vector.shape_cast %23 : vector<8x1xi1> to vector<8x1xi1>
      %25 = vector.broadcast %24 : vector<8x1xi1> to vector<8x128xi1>
      %26 = vector.broadcast %cst_10 : f32 to vector<8x128xf32>
      %27 = arith.select %25, %17, %26 : vector<8x128xi1>, vector<8x128xf32>
      %28 = vector.shape_cast %27 : vector<8x128xf32> to vector<1x8x128xf32>
      %cst_11 = arith.constant dense<0.000000e+00> : vector<8x128xf32>
      %29 = vector.multi_reduction <add>, %28, %cst_11 [0] : vector<1x8x128xf32> to vector<8x128xf32>
      %30 = arith.addf %13, %29 : vector<8x128xf32>
      %c0_12 = arith.constant 0 : index
      %c0_13 = arith.constant 0 : index
      %31 = vector.load %arg4[%c0_12, %c0_13] : memref<8x128xf32, #tpu.memory_space<vmem>>, vector<8x128xf32>
      %32 = arith.addf %31, %30 : vector<8x128xf32>
      %c0_14 = arith.constant 0 : index
      %c0_15 = arith.constant 0 : index
      %33 = vector.load %arg4[%c0_14, %c0_15] : memref<8x128xf32, #tpu.memory_space<vmem>>, vector<8x128xf32>
      tpu.vector_store %arg4[%c0_14, %c0_15], %32 {strides = array<i32>} : memref<8x128xf32, #tpu.memory_space<vmem>>, vector<8x128xf32>,
    } else {
    }
    return
  }
  func.func @transform_0(%arg0: i32, %arg1: i32) -> (i32, i32) {
    %c1_i32 = arith.constant 1 : i32
    %0 = arith.muli %arg0, %c1_i32 : i32
    %1 = arith.addi %0, %arg1 : i32
    %c0_i32 = arith.constant 0 : i32
    %2 = arith.minsi %1, %c0_i32 : i32
    %c0_i32_0 = arith.constant 0 : i32
    %c0_i32_1 = arith.constant 0 : i32
    return %2, %c0_i32_0 : i32, i32
  }
  func.func @transform_1(%arg0: i32, %arg1: i32) -> (i32, i32) {
    %c1_i32 = arith.constant 1 : i32
    %0 = arith.muli %arg0, %c1_i32 : i32
    %1 = arith.addi %0, %arg1 : i32
    %c0_i32 = arith.constant 0 : i32
    %2 = arith.minsi %1, %c0_i32 : i32
    %c0_i32_0 = arith.constant 0 : i32
    %c0_i32_1 = arith.constant 0 : i32
    return %2, %c0_i32_0 : i32, i32
  }
  func.func @transform_2(%arg0: i32, %arg1: i32) -> (i32, i32) {
    %c0_i32 = arith.constant 0 : i32
    %c0_i32_0 = arith.constant 0 : i32
    return %arg0, %c0_i32 : i32, i32
  }
}

</mosaic_0001>

<llo_original>
// kernel: tpu_custom_call.1
$region0: #{tpu_custom_call.1}
  #allocation0 [shape = 'u32[]', space=smem, size = 0x4, offset = 0x4, fixed_abs, tag = 'smem constant byte address 0x4 - core index']
  #allocation1 [shape = 'u32[72,128]{1,0:T(1,128)}', space=vmem, size = 0x9000, scoped, tag = 'internal scratch']
  %s0 = inlined_call_operand.hbm [shape: f32[8,128], index: 0, kind: input, shape index: {}]
  %s1 = inlined_call_operand.hbm [shape: f32[8,128], index: 1, kind: input, shape index: {}]
  %s2 = inlined_call_operand.hbm [shape: f32[8,128], index: 2, kind: output, shape index: {}]
  %s3 = sld [smem:[#allocation0]]
  $region38: #{tpu_custom_call.1} parent=0
    _
  %s5 = ssub.s32 1, %s3
  %s6 = scalar_select 0, %s5, %s3
  $region1: #{tpu_custom_call.1} parent=0
    #allocation2 [shape = 'u8[4096]{0}', space=vmem, size = 0x1000, scoped, tag = 'input window, operand 0, single buffered']
    #allocation3 [shape = 's32[1]{0}', space=sflag, size = 0x4, scoped, tag = 'scoped memory for tpu_custom_call.1']
    #allocation4 [shape = 's32[1]{0}', space=sflag, size = 0x4, scoped, tag = 'scoped memory for tpu_custom_call.1']
    #allocation5 [shape = 'u8[4096]{0}', space=vmem, size = 0x1000, scoped, tag = 'input window, operand 1, single buffered']
    #allocation6 [shape = 's32[1]{0}', space=sflag, size = 0x4, scoped, tag = 'scoped memory for tpu_custom_call.1']
    #allocation7 [shape = 'u8[4096]{0}', space=vmem, size = 0x1000, scoped, tag = 'output window, operand 0, single buffered']
    %7 = vsyncpa [#allocation3], 0
    %8 = vsyncpa [#allocation6], 0
    %9 = vsyncpa [#allocation4], 0
    // Predicated region
    $region2: #{tpu_custom_call.1} parent=1 // pred_check
      _
    $region3: #{tpu_custom_call.1} parent=1 // pred_check_branch
      %11 = sbr.rel (0) target = $region5
    $region4: #{tpu_custom_call.1} parent=1 // pred_region
      %s12 = sadd.s32 0, 0
      %p13 = scmp.lt.s32.totalorder %s12, 0
      %s14 = scalar_select %p13, %s12, 0
      %16 = vsyncadd [#allocation3], 0
      %s17 = smul.addr %s14, 8
      %s18 = scalar_lea.hbm %s0, %s17
      %s20 = sshll.u32 %s18, 4
      %s21 = int_to_ptr.hbm [resolvable:$true] %s20
      %s22 = sshll.u32 [#allocation2], 4
      %s23 = int_to_ptr.vmem [resolvable:$true] %s22
      %25 = dma.hbm_to_vmem [thread:$0]  %s21, 128, %s23, [#allocation3]
    $region5: #{tpu_custom_call.1} parent=1 // pred_fallthru
      _
    // Predicated region
    $region6: #{tpu_custom_call.1} parent=1 // pred_check
      _
    $region7: #{tpu_custom_call.1} parent=1 // pred_check_branch
      %27 = sbr.rel (0) target = $region9
    $region8: #{tpu_custom_call.1} parent=1 // pred_region
      %s28 = sadd.s32 0, 0
      %p29 = scmp.lt.s32.totalorder %s28, 0
      %s30 = scalar_select %p29, %s28, 0
      %32 = vsyncadd [#allocation6], 0
      %s33 = smul.addr %s30, 8
      %s34 = scalar_lea.hbm %s1, %s33
      %s36 = sshll.u32 %s34, 4
      %s37 = int_to_ptr.hbm [resolvable:$true] %s36
      %s38 = sshll.u32 [#allocation5], 4
      %s39 = int_to_ptr.vmem [resolvable:$true] %s38
      %41 = dma.hbm_to_vmem [thread:$0]  %s37, 128, %s39, [#allocation6]
    $region9: #{tpu_custom_call.1} parent=1 // pred_fallthru
      _
    // Predicated region
    $region10: #{tpu_custom_call.1} parent=1 // pred_check
      _
    $region11: #{tpu_custom_call.1} parent=1 // pred_check_branch
      %43 = sbr.rel (0) target = $region13
    $region12: #{tpu_custom_call.1} parent=1 // pred_region
      %45 = dma.done [#allocation3], 128
    $region13: #{tpu_custom_call.1} parent=1 // pred_fallthru
      _
    // Predicated region
    $region14: #{tpu_custom_call.1} parent=1 // pred_check
      _
    $region15: #{tpu_custom_call.1} parent=1 // pred_check_branch
      %47 = sbr.rel (0) target = $region17
    $region16: #{tpu_custom_call.1} parent=1 // pred_region
      %49 = dma.done [#allocation6], 128
    $region17: #{tpu_custom_call.1} parent=1 // pred_fallthru
      _
    %s50 = sadd.s32 0, 0
    %p51 = scmp.lt.s32.totalorder %s50, 0
    %s52 = scalar_select %p51, %s50, 0
    %s53 = sadd.s32 0, 0
    %p54 = scmp.lt.s32.totalorder %s53, 0
    %s55 = scalar_select %p54, %s53, 0
    %p56 = scmp.eq.s32.totalorder 0, 0
    // Predicated region
    $region18: #{tpu_custom_call.1} parent=1 // pred_check
      %p57 = pneg %p56
    $region19: #{tpu_custom_call.1} parent=1 // pred_check_branch
      %59 = sbr.rel (%p57) target = $region21
    $region20: #{tpu_custom_call.1} parent=1 // pred_region
      %60 = vst [vmem:[#allocation7] sm:$0xff] 0.0
    $region21: #{tpu_custom_call.1} parent=1 // pred_fallthru
      _
    %s61 = sadd.s32 0, 0
    %s62 = smul.u32 %s61, 8
    %s63 = sadd.s32 %s62, 8
    %p64 = scmp.gt.s32.totalorder %s63, 8
    %p65 = scmp.le.s32.totalorder %s63, 8
    // Predicated region
    $region22: #{tpu_custom_call.1} parent=1 // pred_check
      %p66 = pneg %p65
    $region23: #{tpu_custom_call.1} parent=1 // pred_check_branch
      %68 = sbr.rel (%p66) target = $region25
    $region24: #{tpu_custom_call.1} parent=1 // pred_region
      %v69 = vld [vmem:[#allocation2] sm:$0xff]
      %v70 = vld [vmem:[#allocation5] sm:$0xff]
      %v71 = vsub.f32 %v70, %v69
      %v72 = vand.u32 2147483647, %v71
      %v73 = vadd.f32 %v72, 0.0
      %v74 = vadd.f32 %v73, 0.0
      %v75 = vld [vmem:[#allocation7] sm:$0xff]
      %v76 = vadd.f32 %v75, %v74
      %77 = vst [vmem:[#allocation7] sm:$0xff] %v76
    $region25: #{tpu_custom_call.1} parent=1 // pred_fallthru
      _
    // Predicated region
    $region26: #{tpu_custom_call.1} parent=1 // pred_check
      %p78 = pneg %p64
    $region27: #{tpu_custom_call.1} parent=1 // pred_check_branch
      %80 = sbr.rel (%p78) target = $region29
    $region28: #{tpu_custom_call.1} parent=1 // pred_region
      %v81 = vld [vmem:[#allocation2] sm:$0xff]
      %v82 = vld [vmem:[#allocation5] sm:$0xff]
      %v83 = vsub.f32 %v82, %v81
      %v84 = vand.u32 2147483647, %v83
      %v85 = vlaneseq
      %v86 = vshrl.u32 %v85, 7
      %v87 = vstv %s62
      %v88 = vadd.s32 %v87, %v86
      %vm89 = vcmp.lt.s32.totalorder %v88, 8
      %v90 = vsel %vm89, 1, 0
      %vm91 = vcmp.eq.s32.totalorder %v90, 1
      %v92 = vsel %vm91, %v84, 0.0
      %v93 = vadd.f32 %v92, 0.0
      %v94 = vadd.f32 %v93, 0.0
      %v95 = vld [vmem:[#allocation7] sm:$0xff]
      %v96 = vadd.f32 %v95, %v94
      %97 = vst [vmem:[#allocation7] sm:$0xff] %v96
    $region29: #{tpu_custom_call.1} parent=1 // pred_fallthru
      _
    // Predicated region
    $region30: #{tpu_custom_call.1} parent=1 // pred_check
      _
    $region31: #{tpu_custom_call.1} parent=1 // pred_check_branch
      %99 = sbr.rel (0) target = $region33
    $region32: #{tpu_custom_call.1} parent=1 // pred_region
      %101 = vsyncadd [#allocation4], 0
      %s103 = sshll.u32 [#allocation7], 4
      %s104 = int_to_ptr.vmem [resolvable:$true] %s103
      %s105 = sshll.u32 %s2, 4
      %s106 = int_to_ptr.hbm [resolvable:$true] %s105
      %108 = dma.vmem_to_hbm [thread:$0]  %s104, 128, %s106, [#allocation4]
    $region33: #{tpu_custom_call.1} parent=1 // pred_fallthru
      _
    // Predicated region
    $region34: #{tpu_custom_call.1} parent=1 // pred_check
      _
    $region35: #{tpu_custom_call.1} parent=1 // pred_check_branch
      %110 = sbr.rel (0) target = $region37
    $region36: #{tpu_custom_call.1} parent=1 // pred_region
      %112 = dma.done [#allocation4], 128
    $region37: #{tpu_custom_call.1} parent=1 // pred_fallthru
      _
    %113 = vsyncpa [#allocation3], 1
    %114 = vsyncpa [#allocation6], 1
    %115 = vsyncpa [#allocation4], 1

</llo_original>
